<compile_context>
chip_gen: v5e
topology: v5e:2x2
jax: 0.10.0
libtpu: 0.0.40
codegen_flags: <defaults>
</compile_context>

<pallas_src>
import functools
import math

import jax
import jax.numpy as jnp
from jax.experimental import pallas as pl
from jax.experimental.pallas import tpu as pltpu

HIDDEN = 128  # fixed by the module: nn.Linear(d_model, 128)


def _sap_kernel(h_ref, w1_ref, b1_ref, w2_ref, o_ref, m_sc, l_sc, acc_sc,
                *, seq_len, block_t, need_mask):
    # h_ref:  (BB, TT, D) current tile (compute dtype, f32 or bf16)
    # w1_ref: (D, 128)    b1_ref: (1, 128) f32
    # w2_ref: (1, 128)    (W2 transposed to a row; b2 dropped)
    # o_ref:  (BB, D)
    # scratch: m_sc (BB,1), l_sc (BB,1), acc_sc (BB,D) -- online-softmax state (f32)
    kt = pl.program_id(1)

    @pl.when(kt == 0)
    def _():
        m_sc[...] = jnp.full_like(m_sc, -jnp.inf)
        l_sc[...] = jnp.zeros_like(l_sc)
        acc_sc[...] = jnp.zeros_like(acc_sc)

    h_blk = h_ref[...]                     # (BB, TT, D)
    bb, tt, d = h_blk.shape
    hf = h_blk.reshape(bb * tt, d)         # layout no-op: tt is a sublane multiple

    # (BB*TT, D) @ (D, 128) on the MXU with f32 accumulation, then ReLU.
    x = jnp.dot(hf, w1_ref[...], preferred_element_type=jnp.float32) + b1_ref[...]
    x = jnp.maximum(x, 0.0)                # (BB*TT, 128) f32

    # 128 -> 1 projection as VPU multiply + lane reduce (keeps the MXU free).
    s = jnp.sum(x * w2_ref[...], axis=-1, keepdims=True)   # (BB*TT, 1) f32
    s = s.reshape(bb, tt, 1)

    h_f32 = h_blk.astype(jnp.float32)
    if need_mask:
        # Ragged tail tile: out-of-range time frames get -inf logits (zero softmax
        # weight) and a zeroed h contribution (guards against garbage/NaN padding).
        t_idx = jax.lax.broadcasted_iota(jnp.int32, (bb, tt, 1), 1)
        valid = (kt * block_t + t_idx) < seq_len
        s = jnp.where(valid, s, -jnp.inf)
        h_f32 = jnp.where(valid, h_f32, 0.0)

    # Online softmax over the time axis.
    m_prev = m_sc[...].reshape(bb, 1, 1)
    m_new = jnp.maximum(m_prev, jnp.max(s, axis=1, keepdims=True))   # (BB,1,1)
    alpha = jnp.exp(m_prev - m_new)                                  # (BB,1,1)
    p = jnp.exp(s - m_new)                                           # (BB,TT,1)

    alpha2 = alpha.reshape(bb, 1)
    l_sc[...] = alpha2 * l_sc[...] + jnp.sum(p, axis=1)              # (BB,1)
    # Weighted sum of h rows: VPU multiply + sublane reduce, f32 accumulation.
    acc_sc[...] = alpha2 * acc_sc[...] + jnp.sum(p * h_f32, axis=1)  # (BB,D)
    m_sc[...] = m_new.reshape(bb, 1)

    @pl.when(kt == pl.num_programs(1) - 1)
    def _():
        inv_l = pl.reciprocal(l_sc[...], approx=True)
        o_ref[...] = (acc_sc[...] * inv_l).astype(o_ref.dtype)


def _choose_block_b(B, block_b):
    """Batch tile: equal to B when small, else a multiple of 8 (legal sub-block)."""
    if B <= block_b:
        return B
    bb = block_b - (block_b % 8)
    return max(bb, 8)


def _choose_block_t(T, D, bb, itemsize, max_block_t, budget_bytes):
    """Largest time tile whose DOUBLE-BUFFERED h footprint fits the VMEM budget,
    rounded down to the dtype's sublane tile (8 f32 / 16 bf16 / 32 int8)."""
    sub = {4: 8, 2: 16, 1: 32}.get(itemsize, 8)
    cap = max(budget_bytes // (2 * bb * D * itemsize), sub)
    cap = min(cap, max_block_t)
    if T <= cap:
        return T                      # whole sequence per step (block dim == full dim)
    return max(cap - (cap % sub), sub)


def self_attentive_pooling(h, w1, b1, w2, b2=None, *, compute_dtype=jnp.bfloat16,
                           block_b=8, max_block_t=1024,
                           h_vmem_budget_bytes=8 << 20):
    """h: (B, T, D). w1: (D, 128), b1: (128,), w2: (128, 1), b2: (1,).

    Returns E: (B, D) in h's original dtype.
    """
    B, T, D = h.shape
    out_dtype = h.dtype

    # b2 is a scalar shift of the softmax logits -> mathematically a no-op.
    del b2

    if compute_dtype is not None and compute_dtype != h.dtype:
        h = h.astype(compute_dtype)          # halves HBM traffic for bf16
        w1 = w1.astype(compute_dtype)        # bf16-native MXU on v6e/v7x

    itemsize = jnp.dtype(h.dtype).itemsize
    w_item = jnp.dtype(w1.dtype).itemsize
    out_item = jnp.dtype(out_dtype).itemsize

    bb = _choose_block_b(B, block_b)
    tt = _choose_block_t(T, D, bb, itemsize, max_block_t, h_vmem_budget_bytes)
    grid = (pl.cdiv(B, bb), pl.cdiv(T, tt))
    need_mask = (T % tt) != 0

    # TODO(synk): on v7x (2 TensorCores) with B <= block_b the batch grid axis has a
    # single step, so only one core is used; block-legality rules (sublane multiple or
    # full-dim blocks) prevent splitting tiny batches further.

    b1_row = b1.reshape(1, HIDDEN).astype(jnp.float32)
    w2_row = w2.reshape(1, HIDDEN).astype(jnp.float32)

    # Explicit scoped-VMEM limit sized from the actual (double-buffered) tiles.
    vmem_needed = (2 * bb * tt * D * itemsize                      # h tile, 2 buffers
                   + 2 * (D * HIDDEN * w_item + 2 * HIDDEN * 4)    # W1 + b1 + w2 rows
                   + 2 * bb * D * out_item                         # output tile
                   + bb * (D + 2) * 4)                             # f32 scratch
    vmem_limit = int(min(max(vmem_needed + (4 << 20), 32 << 20), 120 << 20))

    cost = pl.CostEstimate(
        flops=2 * B * T * (D * HIDDEN + HIDDEN + D),
        transcendentals=B * T,
        bytes_accessed=B * T * D * itemsize + D * HIDDEN * w_item + B * D * out_item)

    kernel = functools.partial(_sap_kernel, seq_len=T, block_t=tt,
                               need_mask=need_mask)

    return pl.pallas_call(
        kernel,
        out_shape=jax.ShapeDtypeStruct((B, D), out_dtype),
        grid_spec=pltpu.PrefetchScalarGridSpec(
            num_scalar_prefetch=0,
            grid=grid,
            in_specs=[
                pl.BlockSpec((bb, tt, D), lambda b, t: (b, t, 0)),   # h
                pl.BlockSpec((D, HIDDEN), lambda b, t: (0, 0)),      # W1
                pl.BlockSpec((1, HIDDEN), lambda b, t: (0, 0)),      # b1
                pl.BlockSpec((1, HIDDEN), lambda b, t: (0, 0)),      # W2 as row
            ],
            out_specs=pl.BlockSpec((bb, D), lambda b, t: (b, 0)),
            scratch_shapes=[
                pltpu.VMEM((bb, 1), jnp.float32),   # running max
                pltpu.VMEM((bb, 1), jnp.float32),   # running denom
                pltpu.VMEM((bb, D), jnp.float32),   # running weighted sum
            ],
        ),
        compiler_params=pltpu.CompilerParams(
            dimension_semantics=("parallel", "arbitrary"),
            vmem_limit_bytes=vmem_limit),
        cost_estimate=cost,
    )(h, w1, b1_row, w2_row)


def _reference(h, w1, b1, w2, b2):
    x = jnp.maximum(h @ w1 + b1, 0.0)            # (B, T, 128)
    s = x @ w2 + b2                              # (B, T, 1)
    a = jax.nn.softmax(s, axis=1)                # softmax over time
    return jnp.einsum("btd,bto->bd", h, a)       # (B, D)


if __name__ == "__main__":
    B, T, D = 2, 16, 32

    key = jax.random.PRNGKey(0)
    k_h, k_w1, k_b1, k_w2, k_b2 = jax.random.split(key, 5)

    h = jax.random.normal(k_h, (B, T, D), dtype=jnp.float32)
    w1 = jax.random.normal(k_w1, (D, HIDDEN), dtype=jnp.float32) * 0.1
    b1 = jax.random.normal(k_b1, (HIDDEN,), dtype=jnp.float32) * 0.1
    w2 = jax.random.normal(k_w2, (HIDDEN, 1), dtype=jnp.float32) * 0.1
    b2 = jax.random.normal(k_b2, (1,), dtype=jnp.float32) * 0.1

    ref = _reference(h, w1, b1, w2, b2)

    # 1) default path: bf16 compute / f32 accumulation, whole sequence per step.
    out = jax.block_until_ready(self_attentive_pooling(h, w1, b1, w2, b2))
    assert out.shape == (B, D) and out.dtype == h.dtype
    assert jnp.allclose(out, ref, atol=1e-1, rtol=1e-1), "bf16 mismatch vs reference"

    # 2) f32 compute, T tiled into two blocks (exercises the online-softmax path).
    out_f32 = jax.block_until_ready(
        self_attentive_pooling(h, w1, b1, w2, b2,
                               compute_dtype=jnp.float32, max_block_t=8))
    assert jnp.allclose(out_f32, ref, atol=2e-3, rtol=2e-3), "f32 tiled mismatch"

    # 3) f32 compute, ragged T=13 (exercises the masked tail tile).
    h13 = h[:, :13, :]
    ref13 = _reference(h13, w1, b1, w2, b2)
    out13 = jax.block_until_ready(
        self_attentive_pooling(h13, w1, b1, w2, b2,
                               compute_dtype=jnp.float32, max_block_t=8))
    assert jnp.allclose(out13, ref13, atol=2e-3, rtol=2e-3), "masked tail mismatch"

    print("KERNEL_OK")
</pallas_src>

<mosaic_0001>
module attributes {stable_mosaic.version = 11 : i64} {
  func.func @_sap_kernel(%arg0: i32, %arg1: i32, %arg2: memref<2x16x32xbf16, #tpu.memory_space<vmem>>, %arg3: memref<32x128xbf16, #tpu.memory_space<vmem>>, %arg4: memref<1x128xf32, #tpu.memory_space<vmem>>, %arg5: memref<1x128xf32, #tpu.memory_space<vmem>>, %arg6: memref<2x32xf32, #tpu.memory_space<vmem>>, %arg7: memref<2x1xf32, #tpu.memory_space<vmem>>, %arg8: memref<2x1xf32, #tpu.memory_space<vmem>>, %arg9: memref<2x32xf32, #tpu.memory_space<vmem>>) attributes {dimension_semantics = [#tpu.dimension_semantics<parallel>, #tpu.dimension_semantics<arbitrary>], iteration_bounds = array<i64: 1, 1>, scalar_prefetch = 0 : i64, scratch_operands = 3 : i64, tpu.core_type = #tpu.core_type<tc>, window_params = [{transform_indices = @transform_0, window_bounds = array<i64: 2, 16, 32>}, {pipeline_mode = #tpu.pipeline_mode<synchronous>, transform_indices = @transform_1, window_bounds = array<i64: 32, 128>}, {pipeline_mode = #tpu.pipeline_mode<synchronous>, transform_indices = @transform_2, window_bounds = array<i64: 1, 128>}, {pipeline_mode = #tpu.pipeline_mode<synchronous>, transform_indices = @transform_3, window_bounds = array<i64: 1, 128>}, {transform_indices = @transform_4, window_bounds = array<i64: 2, 32>}]} {
    %c0_i32 = arith.constant 0 : i32
    %0 = arith.cmpi eq, %arg1, %c0_i32 : i32
    %1 = arith.extui %0 : i1 to i32
    %c0_i32_0 = arith.constant 0 : i32
    %2 = arith.cmpi ne, %1, %c0_i32_0 : i32
    scf.if %2 {
      %cst_28 = arith.constant 0xFF800000 : f32
      %48 = vector.broadcast %cst_28 : f32 to vector<2x1xf32>
      %c0_29 = arith.constant 0 : index
      %c0_30 = arith.constant 0 : index
      %49 = vector.load %arg7[%c0_29, %c0_30] : memref<2x1xf32, #tpu.memory_space<vmem>>, vector<2x1xf32>
      tpu.vector_store %arg7[%c0_29, %c0_30], %48 {strides = array<i32>} : memref<2x1xf32, #tpu.memory_space<vmem>>, vector<2x1xf32>,
      %cst_31 = arith.constant 0.000000e+00 : f32
      %50 = vector.broadcast %cst_31 : f32 to vector<2x1xf32>
      %c0_32 = arith.constant 0 : index
      %c0_33 = arith.constant 0 : index
      %51 = vector.load %arg8[%c0_32, %c0_33] : memref<2x1xf32, #tpu.memory_space<vmem>>, vector<2x1xf32>
      tpu.vector_store %arg8[%c0_32, %c0_33], %50 {strides = array<i32>} : memref<2x1xf32, #tpu.memory_space<vmem>>, vector<2x1xf32>,
      %cst_34 = arith.constant 0.000000e+00 : f32
      %52 = vector.broadcast %cst_34 : f32 to vector<2x32xf32>
      %c0_35 = arith.constant 0 : index
      %c0_36 = arith.constant 0 : index
      %53 = vector.load %arg9[%c0_35, %c0_36] : memref<2x32xf32, #tpu.memory_space<vmem>>, vector<2x32xf32>
      tpu.vector_store %arg9[%c0_35, %c0_36], %52 {strides = array<i32>} : memref<2x32xf32, #tpu.memory_space<vmem>>, vector<2x32xf32>,
    } else {
    }
    %c0 = arith.constant 0 : index
    %c0_1 = arith.constant 0 : index
    %c0_2 = arith.constant 0 : index
    %3 = vector.load %arg2[%c0, %c0_1, %c0_2] : memref<2x16x32xbf16, #tpu.memory_space<vmem>>, vector<2x16x32xbf16>
    %4 = vector.shape_cast %3 : vector<2x16x32xbf16> to vector<32x32xbf16>
    %c0_3 = arith.constant 0 : index
    %c0_4 = arith.constant 0 : index
    %5 = vector.load %arg3[%c0_3, %c0_4] : memref<32x128xbf16, #tpu.memory_space<vmem>>, vector<32x128xbf16>
    %cst = arith.constant dense<0.000000e+00> : vector<32x128xf32>
    %6 = tpu.matmul %4, %5, %cst {dimension_numbers = #tpu.dot_dimension_numbers<[1], [0], [0], [1], [0, 0, 1, 1], [], []>} : vector<32x32xbf16>, vector<32x128xbf16>, vector<32x128xf32> -> vector<32x128xf32>
    %c0_5 = arith.constant 0 : index
    %c0_6 = arith.constant 0 : index
    %7 = vector.load %arg4[%c0_5, %c0_6] : memref<1x128xf32, #tpu.memory_space<vmem>>, vector<1x128xf32>
    %8 = vector.broadcast %7 : vector<1x128xf32> to vector<32x128xf32>
    %9 = arith.addf %6, %8 : vector<32x128xf32>
    %cst_7 = arith.constant 0.000000e+00 : f32
    %10 = vector.broadcast %cst_7 : f32 to vector<32x128xf32>
    %11 = arith.maximumf %9, %10 : vector<32x128xf32>
    %c0_8 = arith.constant 0 : index
    %c0_9 = arith.constant 0 : index
    %12 = vector.load %arg5[%c0_8, %c0_9] : memref<1x128xf32, #tpu.memory_space<vmem>>, vector<1x128xf32>
    %13 = vector.broadcast %12 : vector<1x128xf32> to vector<32x128xf32>
    %14 = arith.mulf %11, %13 : vector<32x128xf32>
    %cst_10 = arith.constant dense<0.000000e+00> : vector<32xf32>
    %15 = vector.multi_reduction <add>, %14, %cst_10 [1] : vector<32x128xf32> to vector<32xf32>
    %16 = vector.shape_cast %15 : vector<32xf32> to vector<32x1xf32>
    %17 = vector.shape_cast %16 : vector<32x1xf32> to vector<2x16x1xf32>
    %18 = arith.extf %3 : vector<2x16x32xbf16> to vector<2x16x32xf32>
    %c0_11 = arith.constant 0 : index
    %c0_12 = arith.constant 0 : index
    %19 = vector.load %arg7[%c0_11, %c0_12] : memref<2x1xf32, #tpu.memory_space<vmem>>, vector<2x1xf32>
    %20 = vector.shape_cast %19 : vector<2x1xf32> to vector<2x1x1xf32>
    %cst_13 = arith.constant dense<0xFF800000> : vector<2x1xf32>
    %21 = vector.multi_reduction <maximumf>, %17, %cst_13 [1] : vector<2x16x1xf32> to vector<2x1xf32>
    %22 = vector.shape_cast %21 : vector<2x1xf32> to vector<2x1x1xf32>
    %23 = arith.maximumf %20, %22 : vector<2x1x1xf32>
    %24 = arith.subf %20, %23 : vector<2x1x1xf32>
    %25 = math.exp %24 : vector<2x1x1xf32>
    %26 = vector.broadcast %23 : vector<2x1x1xf32> to vector<2x16x1xf32>
    %27 = arith.subf %17, %26 : vector<2x16x1xf32>
    %28 = math.exp %27 : vector<2x16x1xf32>
    %29 = vector.shape_cast %25 : vector<2x1x1xf32> to vector<2x1xf32>
    %c0_14 = arith.constant 0 : index
    %c0_15 = arith.constant 0 : index
    %30 = vector.load %arg8[%c0_14, %c0_15] : memref<2x1xf32, #tpu.memory_space<vmem>>, vector<2x1xf32>
    %31 = arith.mulf %29, %30 : vector<2x1xf32>
    %cst_16 = arith.constant dense<0.000000e+00> : vector<2x1xf32>
    %32 = vector.multi_reduction <add>, %28, %cst_16 [1] : vector<2x16x1xf32> to vector<2x1xf32>
    %33 = arith.addf %31, %32 : vector<2x1xf32>
    %c0_17 = arith.constant 0 : index
    %c0_18 = arith.constant 0 : index
    %34 = vector.load %arg8[%c0_17, %c0_18] : memref<2x1xf32, #tpu.memory_space<vmem>>, vector<2x1xf32>
    tpu.vector_store %arg8[%c0_17, %c0_18], %33 {strides = array<i32>} : memref<2x1xf32, #tpu.memory_space<vmem>>, vector<2x1xf32>,
    %c0_19 = arith.constant 0 : index
    %c0_20 = arith.constant 0 : index
    %35 = vector.load %arg9[%c0_19, %c0_20] : memref<2x32xf32, #tpu.memory_space<vmem>>, vector<2x32xf32>
    %36 = vector.broadcast %29 : vector<2x1xf32> to vector<2x32xf32>
    %37 = arith.mulf %36, %35 : vector<2x32xf32>
    %38 = vector.broadcast %28 : vector<2x16x1xf32> to vector<2x16x32xf32>
    %39 = arith.mulf %38, %18 : vector<2x16x32xf32>
    %cst_21 = arith.constant dense<0.000000e+00> : vector<2x32xf32>
    %40 = vector.multi_reduction <add>, %39, %cst_21 [1] : vector<2x16x32xf32> to vector<2x32xf32>
    %41 = arith.addf %37, %40 : vector<2x32xf32>
    %c0_22 = arith.constant 0 : index
    %c0_23 = arith.constant 0 : index
    %42 = vector.load %arg9[%c0_22, %c0_23] : memref<2x32xf32, #tpu.memory_space<vmem>>, vector<2x32xf32>
    tpu.vector_store %arg9[%c0_22, %c0_23], %41 {strides = array<i32>} : memref<2x32xf32, #tpu.memory_space<vmem>>, vector<2x32xf32>,
    %43 = vector.shape_cast %23 : vector<2x1x1xf32> to vector<2x1xf32>
    %c0_24 = arith.constant 0 : index
    %c0_25 = arith.constant 0 : index
    %44 = vector.load %arg7[%c0_24, %c0_25] : memref<2x1xf32, #tpu.memory_space<vmem>>, vector<2x1xf32>
    tpu.vector_store %arg7[%c0_24, %c0_25], %43 {strides = array<i32>} : memref<2x1xf32, #tpu.memory_space<vmem>>, vector<2x1xf32>,
    %c0_i32_26 = arith.constant 0 : i32
    %45 = arith.cmpi eq, %arg1, %c0_i32_26 : i32
    %46 = arith.extui %45 : i1 to i32
    %c0_i32_27 = arith.constant 0 : i32
    %47 = arith.cmpi ne, %46, %c0_i32_27 : i32
    scf.if %47 {
      %c0_28 = arith.constant 0 : index
      %c0_29 = arith.constant 0 : index
      %48 = vector.load %arg8[%c0_28, %c0_29] : memref<2x1xf32, #tpu.memory_space<vmem>>, vector<2x1xf32>
      %49 = tpu.reciprocal %48 {approx = true} : vector<2x1xf32> -> vector<2x1xf32>
      %c0_30 = arith.constant 0 : index
      %c0_31 = arith.constant 0 : index
      %50 = vector.load %arg9[%c0_30, %c0_31] : memref<2x32xf32, #tpu.memory_space<vmem>>, vector<2x32xf32>
      %51 = vector.broadcast %49 : vector<2x1xf32> to vector<2x32xf32>
      %52 = arith.mulf %50, %51 : vector<2x32xf32>
      %c0_32 = arith.constant 0 : index
      %c0_33 = arith.constant 0 : index
      %53 = vector.load %arg6[%c0_32, %c0_33] : memref<2x32xf32, #tpu.memory_space<vmem>>, vector<2x32xf32>
      tpu.vector_store %arg6[%c0_32, %c0_33], %52 {strides = array<i32>} : memref<2x32xf32, #tpu.memory_space<vmem>>, vector<2x32xf32>,
    } else {
    }
    return
  }
  func.func @transform_0(%arg0: i32, %arg1: i32) -> (i32, i32, i32) {
    %c0_i32 = arith.constant 0 : i32
    %c0_i32_0 = arith.constant 0 : i32
    return %arg0, %arg1, %c0_i32 : i32, i32, i32
  }
  func.func @transform_1(%arg0: i32, %arg1: i32) -> (i32, i32) {
    %c0_i32 = arith.constant 0 : i32
    %c0_i32_0 = arith.constant 0 : i32
    %c0_i32_1 = arith.constant 0 : i32
    return %c0_i32, %c0_i32_0 : i32, i32
  }
  func.func @transform_2(%arg0: i32, %arg1: i32) -> (i32, i32) {
    %c0_i32 = arith.constant 0 : i32
    %c0_i32_0 = arith.constant 0 : i32
    %c0_i32_1 = arith.constant 0 : i32
    return %c0_i32, %c0_i32_0 : i32, i32
  }
  func.func @transform_3(%arg0: i32, %arg1: i32) -> (i32, i32) {
    %c0_i32 = arith.constant 0 : i32
    %c0_i32_0 = arith.constant 0 : i32
    %c0_i32_1 = arith.constant 0 : i32
    return %c0_i32, %c0_i32_0 : i32, i32
  }
  func.func @transform_4(%arg0: i32, %arg1: i32) -> (i32, i32) {
    %c0_i32 = arith.constant 0 : i32
    %c0_i32_0 = arith.constant 0 : i32
    return %arg0, %c0_i32 : i32, i32
  }
}

</mosaic_0001>

<llo_original>
// kernel: tpu_custom_call.1
$region0: #{tpu_custom_call.1}
  #allocation0 [shape = 'u32[]', space=smem, size = 0x4, offset = 0x4, fixed_abs, tag = 'smem constant byte address 0x4 - core index']
  #allocation1 [shape = 'u32[72,128]{1,0:T(1,128)}', space=vmem, size = 0x9000, scoped, tag = 'internal scratch']
  #allocation2 [shape = 'f32[2,1]{1,0:T(2,128)}', space=vmem, size = 0x400, scoped, tag = 'scratch operand']
  #allocation3 [shape = 'f32[2,1]{1,0:T(2,128)}', space=vmem, size = 0x400, scoped, tag = 'scratch operand']
  #allocation4 [shape = 'f32[2,32]{1,0:T(2,128)}', space=vmem, size = 0x400, scoped, tag = 'scratch operand']
  %s0 = inlined_call_operand.hbm [shape: bf16[2,16,32], index: 0, kind: input, shape index: {}]
  %s1 = inlined_call_operand.hbm [shape: bf16[32,128], index: 1, kind: input, shape index: {}]
  %s2 = inlined_call_operand.vmem [shape: f32[1,128], index: 2, kind: input, shape index: {}]
  %s3 = inlined_call_operand.vmem [shape: f32[1,128], index: 3, kind: input, shape index: {}]
  %s4 = inlined_call_operand.hbm [shape: f32[2,32], index: 4, kind: output, shape index: {}]
  %s5 = sld [smem:[#allocation0]]
  $region42: #{tpu_custom_call.1} parent=0
    _
  %s7 = ssub.s32 1, %s5
  %s8 = scalar_select 0, %s7, %s5
  $region1: #{tpu_custom_call.1} parent=0
    #allocation5 [shape = 'u8[8192]{0}', space=vmem, size = 0x2000, scoped, tag = 'input window, operand 0, single buffered']
    #allocation6 [shape = 's32[1]{0}', space=sflag, size = 0x4, scoped, tag = 'scoped memory for tpu_custom_call.1']
    #allocation7 [shape = 's32[1]{0}', space=sflag, size = 0x4, scoped, tag = 'scoped memory for tpu_custom_call.1']
    #allocation8 [shape = 'u8[8192]{0}', space=vmem, size = 0x2000, scoped, tag = 'input window, operand 1, single buffered']
    #allocation9 [shape = 's32[1]{0}', space=sflag, size = 0x4, scoped, tag = 'scoped memory for tpu_custom_call.1']
    #allocation10 [shape = 'u8[1024]{0}', space=vmem, size = 0x400, scoped, tag = 'output window, operand 0, single buffered']
    %9 = vsyncpa [#allocation6], 0
    %10 = vsyncpa [#allocation9], 0
    %11 = vsyncpa [#allocation7], 0
    // Predicated region
    $region2: #{tpu_custom_call.1} parent=1 // pred_check
      _
    $region3: #{tpu_custom_call.1} parent=1 // pred_check_branch
      %13 = sbr.rel (0) target = $region5
    $region4: #{tpu_custom_call.1} parent=1 // pred_region
      %15 = vsyncadd [#allocation6], 0
      %s16 = sshll.u32 %s0, 4
      %s17 = int_to_ptr.hbm [resolvable:$true] %s16
      %s18 = sshll.u32 [#allocation5], 4
      %s19 = int_to_ptr.vmem [resolvable:$true] %s18
      %24 = dma.hbm_to_vmem [thread:$0]  %s17, 256, %s19, [#allocation6], 64, 64, 4
    $region5: #{tpu_custom_call.1} parent=1 // pred_fallthru
      _
    // Predicated region
    $region6: #{tpu_custom_call.1} parent=1 // pred_check
      _
    $region7: #{tpu_custom_call.1} parent=1 // pred_check_branch
      %26 = sbr.rel (0) target = $region9
    $region8: #{tpu_custom_call.1} parent=1 // pred_region
      %28 = vsyncadd [#allocation9], 0
      %s29 = sshll.u32 %s1, 4
      %s30 = int_to_ptr.hbm [resolvable:$true] %s29
      %s31 = sshll.u32 [#allocation8], 4
      %s32 = int_to_ptr.vmem [resolvable:$true] %s31
      %37 = dma.hbm_to_vmem [thread:$0]  %s30, 256, %s32, [#allocation9], 64, 64, 4
    $region9: #{tpu_custom_call.1} parent=1 // pred_fallthru
      _
    // Predicated region
    $region10: #{tpu_custom_call.1} parent=1 // pred_check
      _
    $region11: #{tpu_custom_call.1} parent=1 // pred_check_branch
      %39 = sbr.rel (0) target = $region13
    $region12: #{tpu_custom_call.1} parent=1 // pred_region
      _
    $region13: #{tpu_custom_call.1} parent=1 // pred_fallthru
      _
    // Predicated region
    $region14: #{tpu_custom_call.1} parent=1 // pred_check
      _
    $region15: #{tpu_custom_call.1} parent=1 // pred_check_branch
      %41 = sbr.rel (0) target = $region17
    $region16: #{tpu_custom_call.1} parent=1 // pred_region
      _
    $region17: #{tpu_custom_call.1} parent=1 // pred_fallthru
      _
    // Predicated region
    $region18: #{tpu_custom_call.1} parent=1 // pred_check
      _
    $region19: #{tpu_custom_call.1} parent=1 // pred_check_branch
      %43 = sbr.rel (0) target = $region21
    $region20: #{tpu_custom_call.1} parent=1 // pred_region
      %45 = dma.done [#allocation6], 256
    $region21: #{tpu_custom_call.1} parent=1 // pred_fallthru
      _
    // Predicated region
    $region22: #{tpu_custom_call.1} parent=1 // pred_check
      _
    $region23: #{tpu_custom_call.1} parent=1 // pred_check_branch
      %47 = sbr.rel (0) target = $region25
    $region24: #{tpu_custom_call.1} parent=1 // pred_region
      %49 = dma.done [#allocation9], 256
    $region25: #{tpu_custom_call.1} parent=1 // pred_fallthru
      _
    %p51 = scmp.eq.s32.totalorder 0, 0
    // Predicated region
    $region26: #{tpu_custom_call.1} parent=1 // pred_check
      %p52 = pneg %p51
    $region27: #{tpu_custom_call.1} parent=1 // pred_check_branch
      %54 = sbr.rel (%p52) target = $region29
    $region28: #{tpu_custom_call.1} parent=1 // pred_region
      %vm55 = vcmask 1024
      %56 = vst.msk [vmem:[#allocation2] sm:$0x3] %vm55, -inf
      %57 = vst.msk [vmem:[#allocation3] sm:$0x3] %vm55, 0.0
      %vm58 = vcmask 254976
      %59 = vst.msk [vmem:[#allocation4] sm:$0x3] %vm58, 0.0
    $region29: #{tpu_custom_call.1} parent=1 // pred_fallthru
      _
    %v60 = vld [vmem:[#allocation5] sm:$0xf]
    %v61 = vld [vmem:[#allocation5 + $0x4] sm:$0xf]
    %v62 = vld [vmem:[#allocation5 + $0x8] sm:$0xf]
    %v63 = vld [vmem:[#allocation5 + $0xc] sm:$0xf]
    %v64 = vld [vmem:[#allocation8] sm:$0xf]
    %v65 = vld [vmem:[#allocation8 + $0x4] sm:$0xf]
    %v66 = vld [vmem:[#allocation8 + $0x8] sm:$0xf]
    %v67 = vld [vmem:[#allocation8 + $0xc] sm:$0xf]
    %v68 = vld [vmem:[%s2] sm:$0x1]
    %v70 = vperm.slane %v68, 0
    %v76 = vunpack.c.l.b16 %v60
    %v77 = vunpack.c.l.b16 %v61
    %v78 = vunpack.c.l.b16 %v62
    %v79 = vunpack.c.l.b16 %v63
    %v80 = vpack.c.b16 %v77, %v76
    %v81 = vpack.c.b16 %v79, %v78
    %v86 = vunpack.c.l.b16 %v64
    %v87 = vunpack.c.l.b16 %v65
    %v88 = vunpack.c.l.b16 %v66
    %v89 = vunpack.c.l.b16 %v67
    %v90 = vpack.c.b16 %v87, %v86
    %v91 = vpack.c.b16 %v89, %v88
    %vm94 = vcmask 261120
    %v96 = vsel %vm94, %v80, 0
    %v99 = vsel %vm94, %v81, 0
    %101 = vmatpush.bf16.msra.mxu0 0
    %102 = vmatpush.bf16.msra.mxu0 0
    %103 = vmatpush.bf16.msra.mxu0 0
    %104 = vmatpush.bf16.msra.mxu0 0
    %105 = vmatpush.bf16.msra.mxu0 0
    %106 = vmatpush.bf16.msra.mxu0 0
    %107 = vmatpush.bf16.msra.mxu0 %v91
    %108 = vmatpush.bf16.msra.mxu0 %v90
    %109 = vmatmul.bf16.gmra.mxu0 %v96
    %v110 = vpop.f32.mrf.mxu0
    %v111 = vadd.f32 %v70, %v110
    %v112 = vpop.f32.mrf.mxu0
    %v113 = vadd.f32 %v70, %v112
    %114 = vmatmul.bf16.gmra.mxu0 %v99
    %v115 = vpop.f32.mrf.mxu0
    %v116 = vadd.f32 %v70, %v115
    %v117 = vpop.f32.mrf.mxu0
    %v118 = vadd.f32 %v70, %v117
    %119 = vdwg.mxu0
    %v120 = vmax.f32 %v111, 0.0
    %v121 = vmax.f32 %v113, 0.0
    %v122 = vmax.f32 %v116, 0.0
    %v123 = vmax.f32 %v118, 0.0
    %v124 = vld [vmem:[%s3] sm:$0x1]
    %v126 = vperm.slane %v124, 0
    %v128 = vmul.f32 %v120, %v126
    %v129 = vmul.f32 %v121, %v126
    %v130 = vmul.f32 %v122, %v126
    %v131 = vmul.f32 %v123, %v126
    %132 = vadd.xlane.f32.xlu0 %v128
    %v133 = vpop.xlane.xlu0 %132
    %134 = vadd.xlane.f32.xlu0 %v129
    %v135 = vpop.xlane.xlu0 %134
    %136 = vadd.xlane.f32.xlu0 %v130
    %v137 = vpop.xlane.xlu0 %136
    %138 = vadd.xlane.f32.xlu0 %v131
    %v139 = vpop.xlane.xlu0 %138
    %v140 = vunpack.c.l.bf16 %v60
    %v141 = vunpack.c.l.bf16 %v61
    %v142 = vunpack.c.l.bf16 %v62
    %v143 = vunpack.c.l.bf16 %v63
    %v144 = vld [vmem:[#allocation2] sm:$0x3]
    %v146 = vrot.slane %v144, 1
    %v148 = vmax.f32 %v133, %v135
    %v149 = vrot.slane %v148, 4
    %v150 = vmax.f32 %v148, %v149
    %v151 = vrot.slane %v150, 2
    %v152 = vmax.f32 %v150, %v151
    %v153 = vrot.slane %v152, 1
    %v154 = vmax.f32 %v152, %v153
    %v155 = vmax.f32 %v137, %v139
    %v156 = vrot.slane %v155, 4
    %v157 = vmax.f32 %v155, %v156
    %v158 = vrot.slane %v157, 2
    %v159 = vmax.f32 %v157, %v158
    %v160 = vrot.slane %v159, 1
    %v161 = vmax.f32 %v159, %v160
    %v162 = vmax.f32 %v144, %v154
    %v163 = vmax.f32 %v146, %v161
    %v164 = vsub.f32 %v144, %v162
    %v165 = vsub.f32 %v146, %v163
    %v166 = vmul.f32 %v164, 1.442695
    %v167 = vpow.pop %v166
    %v168 = vmul.f32 %v165, 1.442695
    %v169 = vpow.pop %v168
    %v172 = vperm.slane %v162, 0
    %v173 = vperm.slane %v163, 0
    %v176 = vsub.f32 %v133, %v172
    %v177 = vsub.f32 %v135, %v172
    %v178 = vsub.f32 %v137, %v173
    %v179 = vsub.f32 %v139, %v173
    %v180 = vmul.f32 %v176, 1.442695
    %v181 = vpow.pop %v180
    %v182 = vmul.f32 %v177, 1.442695
    %v183 = vpow.pop %v182
    %v184 = vmul.f32 %v178, 1.442695
    %v185 = vpow.pop %v184
    %v186 = vmul.f32 %v179, 1.442695
    %v187 = vpow.pop %v186
    %v188 = vld [vmem:[#allocation3] sm:$0x3]
    %v190 = vrot.slane %v188, 1
    %v192 = vmul.f32 %v167, %v188
    %v193 = vmul.f32 %v169, %v190
    %vm194 = vcmask 7168
    %v195 = vsel %vm194, %v181, 0.0
    %v196 = vsel %vm194, %v183, 0.0
    %v197 = vadd.f32 %v195, %v196
    %v198 = vrot.slane %v197, 4
    %v199 = vadd.f32 %v197, %v198
    %v200 = vrot.slane %v199, 2
    %v201 = vadd.f32 %v199, %v200
    %v202 = vrot.slane %v201, 1
    %v203 = vadd.f32 %v201, %v202
    %v204 = vsel %vm194, %v185, 0.0
    %v205 = vsel %vm194, %v187, 0.0
    %v206 = vadd.f32 %v204, %v205
    %v207 = vrot.slane %v206, 4
    %v208 = vadd.f32 %v206, %v207
    %v209 = vrot.slane %v208, 2
    %v210 = vadd.f32 %v208, %v209
    %v211 = vrot.slane %v210, 1
    %v212 = vadd.f32 %v210, %v211
    %v213 = vadd.f32 %v192, %v203
    %v214 = vadd.f32 %v193, %v212
    %217 = vst [vmem:[#allocation1] ss:$9 sm:$0xff] %v213
    %s218 = scalar_lea.vmem [#allocation1], 1
    %219 = vst [vmem:[%s218] ss:$9 sm:$0xff] %v214
    %v220 = vld [vmem:[#allocation1] sm:$0xff]
    %vm222 = vcmask 1024
    %223 = vst.msk [vmem:[#allocation3] sm:$0x3] %vm222, %v220
    %v224 = vld [vmem:[#allocation4] sm:$0x3]
    %226 = vset.pattern.permute.xlu0 0
    %227 = vperm.xlu0 %226, %v167
    %v228 = vpop.permute.xlu0 %227
    %v230 = vperm.slane %v228, 0
    %232 = vset.pattern.permute.xlu0 0
    %233 = vperm.xlu0 %232, %v169
    %v234 = vpop.permute.xlu0 %233
    %v236 = vperm.slane %v234, 0
    %v238 = vrot.slane %v224, 1
    %v240 = vmul.f32 %v230, %v224
    %v241 = vmul.f32 %v236, %v238
    %243 = vset.pattern.permute.xlu0 0
    %244 = vperm.xlu0 %243, %v181
    %v245 = vpop.permute.xlu0 %244
    %248 = vset.pattern.permute.xlu0 0
    %249 = vperm.xlu0 %248, %v183
    %v250 = vpop.permute.xlu0 %249
    %253 = vset.pattern.permute.xlu0 0
    %254 = vperm.xlu0 %253, %v185
    %v255 = vpop.permute.xlu0 %254
    %258 = vset.pattern.permute.xlu0 0
    %259 = vperm.xlu0 %258, %v187
    %v260 = vpop.permute.xlu0 %259
    %v262 = vmul.f32 %v245, %v140
    %v263 = vmul.f32 %v250, %v141
    %v264 = vmul.f32 %v255, %v142
    %v265 = vmul.f32 %v260, %v143
    %v266 = vsel %vm94, %v262, 0.0
    %v267 = vsel %vm94, %v263, 0.0
    %v268 = vadd.f32 %v266, %v267
    %v269 = vrot.slane %v268, 4
    %v270 = vadd.f32 %v268, %v269
    %v271 = vrot.slane %v270, 2
    %v272 = vadd.f32 %v270, %v271
    %v273 = vrot.slane %v272, 1
    %v274 = vadd.f32 %v272, %v273
    %v275 = vsel %vm94, %v264, 0.0
    %v276 = vsel %vm94, %v265, 0.0
    %v277 = vadd.f32 %v275, %v276
    %v278 = vrot.slane %v277, 4
    %v279 = vadd.f32 %v277, %v278
    %v280 = vrot.slane %v279, 2
    %v281 = vadd.f32 %v279, %v280
    %v282 = vrot.slane %v281, 1
    %v283 = vadd.f32 %v281, %v282
    %v284 = vadd.f32 %v240, %v274
    %v285 = vadd.f32 %v241, %v283
    %288 = vst [vmem:[#allocation1] ss:$9 sm:$0xff] %v284
    %s289 = scalar_lea.vmem [#allocation1], 1
    %290 = vst [vmem:[%s289] ss:$9 sm:$0xff] %v285
    %v291 = vld [vmem:[#allocation1] sm:$0xff]
    %vm293 = vcmask 254976
    %294 = vst.msk [vmem:[#allocation4] sm:$0x3] %vm293, %v291
    %295 = vst [vmem:[#allocation1] ss:$9 sm:$0xff] %v162
    %s296 = scalar_lea.vmem [#allocation1], 1
    %297 = vst [vmem:[%s296] ss:$9 sm:$0xff] %v163
    %v298 = vld [vmem:[#allocation1] sm:$0xff]
    %300 = vst.msk [vmem:[#allocation2] sm:$0x3] %vm222, %v298
    // Predicated region
    $region30: #{tpu_custom_call.1} parent=1 // pred_check
      %p301 = pneg %p51
    $region31: #{tpu_custom_call.1} parent=1 // pred_check_branch
      %303 = sbr.rel (%p301) target = $region33
    $region32: #{tpu_custom_call.1} parent=1 // pred_region
      %v304 = vld [vmem:[#allocation3] sm:$0x3]
      %v305 = vrcp.pop %v304
      %v306 = vld [vmem:[#allocation4] sm:$0x3]
      %308 = vset.pattern.permute.xlu0 0
      %309 = vperm.xlu0 %308, %v305
      %v310 = vpop.permute.xlu0 %309
      %v312 = vmul.f32 %v306, %v310
      %313 = vst.msk [vmem:[#allocation10] sm:$0x3] %vm293, %v312
    $region33: #{tpu_custom_call.1} parent=1 // pred_fallthru
      _
    // Predicated region
    $region34: #{tpu_custom_call.1} parent=1 // pred_check
      _
    $region35: #{tpu_custom_call.1} parent=1 // pred_check_branch
      %315 = sbr.rel (0) target = $region37
    $region36: #{tpu_custom_call.1} parent=1 // pred_region
      %317 = vsyncadd [#allocation7], 0
      %s319 = sshll.u32 [#allocation10], 4
      %s320 = int_to_ptr.vmem [resolvable:$true] %s319
      %s321 = sshll.u32 %s4, 4
      %s322 = int_to_ptr.hbm [resolvable:$true] %s321
      %324 = dma.vmem_to_hbm [thread:$0]  %s320, 32, %s322, [#allocation7]
    $region37: #{tpu_custom_call.1} parent=1 // pred_fallthru
      _
    // Predicated region
    $region38: #{tpu_custom_call.1} parent=1 // pred_check
      _
    $region39: #{tpu_custom_call.1} parent=1 // pred_check_branch
      %326 = sbr.rel (0) target = $region41
    $region40: #{tpu_custom_call.1} parent=1 // pred_region
      %328 = dma.done [#allocation7], 32
    $region41: #{tpu_custom_call.1} parent=1 // pred_fallthru
      _
    %329 = vsyncpa [#allocation6], 1
    %330 = vsyncpa [#allocation9], 1
    %331 = vsyncpa [#allocation7], 1

</llo_original>
